<compile_context>
chip_gen: v5e
topology: v5e:2x2
jax: 0.10.0
libtpu: 0.0.40
codegen_flags: <defaults>
</compile_context>

<pallas_src>
import functools

import jax
import jax.numpy as jnp
from jax.experimental import pallas as pl
from jax.experimental.pallas import tpu as pltpu

EPS = 1e-5
_NEG_BIG = -1e30   # bias for padded logit lanes -> exp() == 0, softmax unchanged


def _round_up(x, m):
    return (x + m - 1) // m * m


# ----------------------------------------------------------------------------
# Single fused kernel, gridded over batch tiles only.
#   per-branch: fc1 -> ReLU -> fc2 -> ReLU   (BN folded into W/b, Dropout = id)
#   bilinear product over branches -> fc3 (lane padded) -> softmax
# Refs: [x_0..x_{n-1}, w1_0.., b1_0.., w2_0.., b2_0.., w3, b3, out]
# ----------------------------------------------------------------------------
def _fused_bilinear_kernel(*refs, n_branch):
    n = n_branch
    x_refs = refs[0 * n:1 * n]
    w1_refs = refs[1 * n:2 * n]
    b1_refs = refs[2 * n:3 * n]
    w2_refs = refs[3 * n:4 * n]
    b2_refs = refs[4 * n:5 * n]
    w3_ref = refs[5 * n]
    b3_ref = refs[5 * n + 1]
    o_ref = refs[5 * n + 2]

    cdt = w3_ref.dtype                       # compute dtype for MXU inputs

    fused = None
    for i in range(n):
        x = x_refs[i][...].astype(cdt)       # (bm, in_dim_i); cast is free VPU work
        # fc1 (+folded BN) + ReLU.  Biases stay f32.
        h = jnp.dot(x, w1_refs[i][...], preferred_element_type=jnp.float32)
        h = jnp.maximum(h + b1_refs[i][...], 0.0).astype(cdt)          # (bm, D)
        # fc2 (+folded BN) + ReLU — per-branch (bm,D)x(D,D), no block-diag waste.
        h = jnp.dot(h, w2_refs[i][...], preferred_element_type=jnp.float32)
        h = jnp.maximum(h + b2_refs[i][...], 0.0)                       # (bm, D) f32
        fused = h if fused is None else fused * h                       # bilinear product

    # fc3 (columns padded to 128 with zero weights / -1e30 bias) + softmax.
    logits = jnp.dot(fused.astype(cdt), w3_ref[...],
                     preferred_element_type=jnp.float32) + b3_ref[...]
    m = jnp.max(logits, axis=-1, keepdims=True)
    e = jnp.exp(logits - m)                  # padded lanes -> exactly 0
    inv = pl.reciprocal(jnp.sum(e, axis=-1, keepdims=True), approx=True)  # EUP slot
    o_ref[...] = (e * inv).astype(o_ref.dtype)


# ----------------------------------------------------------------------------
# Host-side parameter preparation: fold eval BN into Linear, keep per-branch
# weights (no block-diag zero padding), pad fc3 to lane-dense width.
# ----------------------------------------------------------------------------
def _fold_bn(w, b, g, be, m, v, eps=EPS):
    scale = g / jnp.sqrt(v + eps)            # (1, out)
    return w * scale, (b - m) * scale + be


def prepare_params(params, compute_dtype=jnp.bfloat16):
    branches = params["branches"]
    n = len(branches)
    D = branches[0]["w1"].shape[1]

    w1s, b1s, w2s, b2s = [], [], [], []
    for p in branches:
        w1f, b1f = _fold_bn(p["w1"], p["b1"], p["g1"], p["be1"], p["m1"], p["v1"])
        w2f, b2f = _fold_bn(p["w2"], p["b2"], p["g2"], p["be2"], p["m2"], p["v2"])
        w1s.append(w1f.astype(compute_dtype))
        b1s.append(b1f.astype(jnp.float32))          # biases stay f32
        w2s.append(w2f.astype(compute_dtype))
        b2s.append(b2f.astype(jnp.float32))

    C = params["w3"].shape[1]
    Cp = _round_up(C, 128)                   # lane-dense head output
    w3p = jnp.zeros((D, Cp), jnp.float32).at[:, :C].set(params["w3"])
    b3p = jnp.full((1, Cp), _NEG_BIG, jnp.float32).at[:, :C].set(params["b3"])  # keep f32

    return {
        "w1": w1s, "b1": b1s, "w2": w2s, "b2": b2s,
        "w3": w3p.astype(compute_dtype), "b3": b3p,
        "n_branch": n, "feat_dim": D, "class_num": C,
        "in_dims": [p["w1"].shape[0] for p in branches],
    }


# ----------------------------------------------------------------------------
# Forward wrapper: one pallas_call, batch-tiled, per-branch inputs (no concat,
# no pad, no pre-kernel XLA passes over the activations).
# ----------------------------------------------------------------------------
def bilinear_forward(feats_list, prepared, *, bm=1024, out_dtype=jnp.float32):
    n = prepared["n_branch"]
    C = prepared["class_num"]
    Cp = prepared["w3"].shape[1]
    in_dims = prepared["in_dims"]
    assert len(feats_list) == n
    B = feats_list[0].shape[0]
    for f, k in zip(feats_list, in_dims):
        assert f.shape == (B, k)

    # Batch tile: multiple of 16 (covers f32 (8,*) and bf16 (16,*) sublane
    # packing).  Clamp to ceil(B/2) rounded up so the grid has >=2 tiles when
    # B > 16 -> megacore ("parallel") actually uses both v7x TensorCores.
    half = _round_up(-(-B // 2), 16)
    bm_eff = max(16, min(_round_up(bm, 16), half))
    grid = (pl.cdiv(B, bm_eff),)             # uneven last block: OOB writes dropped

    kernel = functools.partial(_fused_bilinear_kernel, n_branch=n)
    resident = lambda a: pl.BlockSpec(a.shape, lambda i: (0, 0))      # grid-invariant
    batch_spec = lambda k: pl.BlockSpec((bm_eff, k), lambda i: (i, 0))

    in_specs = ([batch_spec(k) for k in in_dims]
                + [resident(w) for w in prepared["w1"]]
                + [resident(b) for b in prepared["b1"]]
                + [resident(w) for w in prepared["w2"]]
                + [resident(b) for b in prepared["b2"]]
                + [resident(prepared["w3"]), resident(prepared["b3"])])

    probs_padded = pl.pallas_call(
        kernel,
        out_shape=jax.ShapeDtypeStruct((B, Cp), out_dtype),
        grid=grid,
        in_specs=in_specs,
        out_specs=pl.BlockSpec((bm_eff, Cp), lambda i: (i, 0)),
        compiler_params=pltpu.CompilerParams(
            dimension_semantics=("parallel",),        # megacore sharding on v7x
            vmem_limit_bytes=32 * 1024 * 1024,        # explicit; plenty of headroom
        ),
    )(*feats_list, *prepared["w1"], *prepared["b1"],
      *prepared["w2"], *prepared["b2"], prepared["w3"], prepared["b3"])

    return probs_padded[:, :C]


# ----------------------------------------------------------------------------
# Deterministic parameter construction + pure-JAX references
# ----------------------------------------------------------------------------
def init_params(key, in_dims, out_dim, class_num):
    params = {"branches": []}
    for indim in in_dims:
        key, *ks = jax.random.split(key, 13)
        p = {
            "w1": 0.05 * jax.random.normal(ks[0], (indim, out_dim), jnp.float32),
            "b1": 0.05 * jax.random.normal(ks[1], (1, out_dim), jnp.float32),
            "g1": 1.0 + 0.1 * jax.random.normal(ks[2], (1, out_dim), jnp.float32),
            "be1": 0.1 * jax.random.normal(ks[3], (1, out_dim), jnp.float32),
            "m1": 0.1 * jax.random.normal(ks[4], (1, out_dim), jnp.float32),
            "v1": 0.5 + jnp.abs(jax.random.normal(ks[5], (1, out_dim), jnp.float32)),
            "w2": 0.05 * jax.random.normal(ks[6], (out_dim, out_dim), jnp.float32),
            "b2": 0.05 * jax.random.normal(ks[7], (1, out_dim), jnp.float32),
            "g2": 1.0 + 0.1 * jax.random.normal(ks[8], (1, out_dim), jnp.float32),
            "be2": 0.1 * jax.random.normal(ks[9], (1, out_dim), jnp.float32),
            "m2": 0.1 * jax.random.normal(ks[10], (1, out_dim), jnp.float32),
            "v2": 0.5 + jnp.abs(jax.random.normal(ks[11], (1, out_dim), jnp.float32)),
        }
        params["branches"].append(p)
    key, k1, k2 = jax.random.split(key, 3)
    params["w3"] = 0.05 * jax.random.normal(k1, (out_dim, class_num), jnp.float32)
    params["b3"] = 0.05 * jax.random.normal(k2, (1, class_num), jnp.float32)
    return params


def reference_forward(feats_list, params):
    """Unfolded eval-mode reference (mirrors the PyTorch module)."""
    def bn(h, g, be, m, v):
        return (h - m) / jnp.sqrt(v + EPS) * g + be

    outs = []
    for x, p in zip(feats_list, params["branches"]):
        h = x @ p["w1"] + p["b1"]
        h = jnp.maximum(bn(h, p["g1"], p["be1"], p["m1"], p["v1"]), 0.0)
        h = h @ p["w2"] + p["b2"]
        h = jnp.maximum(bn(h, p["g2"], p["be2"], p["m2"], p["v2"]), 0.0)
        outs.append(h)
    fused = outs[0]
    for o in outs[1:]:
        fused = fused * o
    logits = fused @ params["w3"] + params["b3"]
    return jax.nn.softmax(logits, axis=-1)


def reference_forward_folded(feats_list, prepared):
    """Reference using exactly the prepared (folded, per-branch) f32 weights."""
    fused = None
    for i in range(prepared["n_branch"]):
        x = feats_list[i].astype(jnp.float32)
        h = jnp.maximum(x @ prepared["w1"][i].astype(jnp.float32)
                        + prepared["b1"][i], 0.0)
        h = jnp.maximum(h @ prepared["w2"][i].astype(jnp.float32)
                        + prepared["b2"][i], 0.0)
        fused = h if fused is None else fused * h
    logits = fused @ prepared["w3"].astype(jnp.float32) + prepared["b3"]
    return jax.nn.softmax(logits, axis=-1)[:, :prepared["class_num"]]


if __name__ == "__main__":
    key = jax.random.PRNGKey(0)

    B = 20                      # not a multiple of the tile -> uneven-last-block path
    in_dims = [32, 64]          # two feature branches -> exercises the bilinear product
    out_dim = 128
    class_num = 16

    key, kx0, kx1, kp = jax.random.split(key, 4)
    feats_list = [
        jax.random.normal(kx0, (B, in_dims[0]), jnp.float32),
        jax.random.normal(kx1, (B, in_dims[1]), jnp.float32),
    ]
    params = init_params(kp, in_dims, out_dim, class_num)

    ref = reference_forward(feats_list, params)

    # ---- f32 path (bm clamps to 16 -> grid of 2 batch tiles, exercises both
    #      pipelining and the partial last block) ----
    prep_f32 = prepare_params(params, jnp.float32)
    probs_f32 = jax.block_until_ready(bilinear_forward(feats_list, prep_f32))
    assert probs_f32.shape == (B, class_num)
    ref_folded = reference_forward_folded(feats_list, prep_f32)
    assert jnp.allclose(probs_f32, ref_folded, atol=5e-3, rtol=5e-3), \
        "kernel mismatch vs folded f32 reference"
    assert jnp.allclose(probs_f32, ref, atol=5e-3, rtol=5e-3), \
        "kernel mismatch vs unfolded (PyTorch-semantics) reference"
    assert jnp.allclose(jnp.sum(probs_f32, axis=-1), 1.0, atol=5e-3), \
        "softmax not normalized"

    # ---- bf16 path (default compute dtype; bf16 MXU, f32 accumulation,
    #      f32 biases) with optional bf16 probability output ----
    prep_bf16 = prepare_params(params)               # default compute_dtype=bf16
    probs_bf16 = jax.block_until_ready(
        bilinear_forward(feats_list, prep_bf16, out_dtype=jnp.bfloat16))
    assert probs_bf16.shape == (B, class_num)
    assert jnp.allclose(probs_bf16.astype(jnp.float32), ref, atol=3e-2, rtol=3e-2), \
        "bf16 kernel mismatch vs reference"

    print("KERNEL_OK")
</pallas_src>

<mosaic_0001>
module attributes {stable_mosaic.version = 11 : i64} {
  func.func @_fused_bilinear_kernel(%arg0: i32, %arg1: memref<16x32xf32, #tpu.memory_space<vmem>>, %arg2: memref<16x64xf32, #tpu.memory_space<vmem>>, %arg3: memref<32x128xf32, #tpu.memory_space<vmem>>, %arg4: memref<64x128xf32, #tpu.memory_space<vmem>>, %arg5: memref<1x128xf32, #tpu.memory_space<vmem>>, %arg6: memref<1x128xf32, #tpu.memory_space<vmem>>, %arg7: memref<128x128xf32, #tpu.memory_space<vmem>>, %arg8: memref<128x128xf32, #tpu.memory_space<vmem>>, %arg9: memref<1x128xf32, #tpu.memory_space<vmem>>, %arg10: memref<1x128xf32, #tpu.memory_space<vmem>>, %arg11: memref<128x128xf32, #tpu.memory_space<vmem>>, %arg12: memref<1x128xf32, #tpu.memory_space<vmem>>, %arg13: memref<16x128xf32, #tpu.memory_space<vmem>>) attributes {dimension_semantics = [#tpu.dimension_semantics<parallel>], iteration_bounds = array<i64: 2>, scalar_prefetch = 0 : i64, scratch_operands = 0 : i64, tpu.core_type = #tpu.core_type<tc>, window_params = [{transform_indices = @transform_0, window_bounds = array<i64: 16, 32>}, {transform_indices = @transform_1, window_bounds = array<i64: 16, 64>}, {pipeline_mode = #tpu.pipeline_mode<synchronous>, transform_indices = @transform_2, window_bounds = array<i64: 32, 128>}, {pipeline_mode = #tpu.pipeline_mode<synchronous>, transform_indices = @transform_3, window_bounds = array<i64: 64, 128>}, {pipeline_mode = #tpu.pipeline_mode<synchronous>, transform_indices = @transform_4, window_bounds = array<i64: 1, 128>}, {pipeline_mode = #tpu.pipeline_mode<synchronous>, transform_indices = @transform_5, window_bounds = array<i64: 1, 128>}, {pipeline_mode = #tpu.pipeline_mode<synchronous>, transform_indices = @transform_6, window_bounds = array<i64: 128, 128>}, {pipeline_mode = #tpu.pipeline_mode<synchronous>, transform_indices = @transform_7, window_bounds = array<i64: 128, 128>}, {pipeline_mode = #tpu.pipeline_mode<synchronous>, transform_indices = @transform_8, window_bounds = array<i64: 1, 128>}, {pipeline_mode = #tpu.pipeline_mode<synchronous>, transform_indices = @transform_9, window_bounds = array<i64: 1, 128>}, {pipeline_mode = #tpu.pipeline_mode<synchronous>, transform_indices = @transform_10, window_bounds = array<i64: 128, 128>}, {pipeline_mode = #tpu.pipeline_mode<synchronous>, transform_indices = @transform_11, window_bounds = array<i64: 1, 128>}, {transform_indices = @transform_12, window_bounds = array<i64: 16, 128>}]} {
    %c0 = arith.constant 0 : index
    %c0_0 = arith.constant 0 : index
    %0 = vector.load %arg1[%c0, %c0_0] : memref<16x32xf32, #tpu.memory_space<vmem>>, vector<16x32xf32>
    %c0_1 = arith.constant 0 : index
    %c0_2 = arith.constant 0 : index
    %1 = vector.load %arg3[%c0_1, %c0_2] : memref<32x128xf32, #tpu.memory_space<vmem>>, vector<32x128xf32>
    %cst = arith.constant dense<0.000000e+00> : vector<16x128xf32>
    %2 = tpu.matmul %0, %1, %cst {dimension_numbers = #tpu.dot_dimension_numbers<[1], [0], [0], [1], [0, 0, 1, 1], [], []>} : vector<16x32xf32>, vector<32x128xf32>, vector<16x128xf32> -> vector<16x128xf32>
    %c0_3 = arith.constant 0 : index
    %c0_4 = arith.constant 0 : index
    %3 = vector.load %arg5[%c0_3, %c0_4] : memref<1x128xf32, #tpu.memory_space<vmem>>, vector<1x128xf32>
    %4 = vector.broadcast %3 : vector<1x128xf32> to vector<16x128xf32>
    %5 = arith.addf %2, %4 : vector<16x128xf32>
    %cst_5 = arith.constant 0.000000e+00 : f32
    %6 = vector.broadcast %cst_5 : f32 to vector<16x128xf32>
    %7 = arith.maximumf %5, %6 : vector<16x128xf32>
    %c0_6 = arith.constant 0 : index
    %c0_7 = arith.constant 0 : index
    %8 = vector.load %arg7[%c0_6, %c0_7] : memref<128x128xf32, #tpu.memory_space<vmem>>, vector<128x128xf32>
    %cst_8 = arith.constant dense<0.000000e+00> : vector<16x128xf32>
    %9 = tpu.matmul %7, %8, %cst_8 {dimension_numbers = #tpu.dot_dimension_numbers<[1], [0], [0], [1], [0, 0, 1, 1], [], []>} : vector<16x128xf32>, vector<128x128xf32>, vector<16x128xf32> -> vector<16x128xf32>
    %c0_9 = arith.constant 0 : index
    %c0_10 = arith.constant 0 : index
    %10 = vector.load %arg9[%c0_9, %c0_10] : memref<1x128xf32, #tpu.memory_space<vmem>>, vector<1x128xf32>
    %11 = vector.broadcast %10 : vector<1x128xf32> to vector<16x128xf32>
    %12 = arith.addf %9, %11 : vector<16x128xf32>
    %cst_11 = arith.constant 0.000000e+00 : f32
    %13 = vector.broadcast %cst_11 : f32 to vector<16x128xf32>
    %14 = arith.maximumf %12, %13 : vector<16x128xf32>
    %c0_12 = arith.constant 0 : index
    %c0_13 = arith.constant 0 : index
    %15 = vector.load %arg2[%c0_12, %c0_13] : memref<16x64xf32, #tpu.memory_space<vmem>>, vector<16x64xf32>
    %c0_14 = arith.constant 0 : index
    %c0_15 = arith.constant 0 : index
    %16 = vector.load %arg4[%c0_14, %c0_15] : memref<64x128xf32, #tpu.memory_space<vmem>>, vector<64x128xf32>
    %cst_16 = arith.constant dense<0.000000e+00> : vector<16x128xf32>
    %17 = tpu.matmul %15, %16, %cst_16 {dimension_numbers = #tpu.dot_dimension_numbers<[1], [0], [0], [1], [0, 0, 1, 1], [], []>} : vector<16x64xf32>, vector<64x128xf32>, vector<16x128xf32> -> vector<16x128xf32>
    %c0_17 = arith.constant 0 : index
    %c0_18 = arith.constant 0 : index
    %18 = vector.load %arg6[%c0_17, %c0_18] : memref<1x128xf32, #tpu.memory_space<vmem>>, vector<1x128xf32>
    %19 = vector.broadcast %18 : vector<1x128xf32> to vector<16x128xf32>
    %20 = arith.addf %17, %19 : vector<16x128xf32>
    %cst_19 = arith.constant 0.000000e+00 : f32
    %21 = vector.broadcast %cst_19 : f32 to vector<16x128xf32>
    %22 = arith.maximumf %20, %21 : vector<16x128xf32>
    %c0_20 = arith.constant 0 : index
    %c0_21 = arith.constant 0 : index
    %23 = vector.load %arg8[%c0_20, %c0_21] : memref<128x128xf32, #tpu.memory_space<vmem>>, vector<128x128xf32>
    %cst_22 = arith.constant dense<0.000000e+00> : vector<16x128xf32>
    %24 = tpu.matmul %22, %23, %cst_22 {dimension_numbers = #tpu.dot_dimension_numbers<[1], [0], [0], [1], [0, 0, 1, 1], [], []>} : vector<16x128xf32>, vector<128x128xf32>, vector<16x128xf32> -> vector<16x128xf32>
    %c0_23 = arith.constant 0 : index
    %c0_24 = arith.constant 0 : index
    %25 = vector.load %arg10[%c0_23, %c0_24] : memref<1x128xf32, #tpu.memory_space<vmem>>, vector<1x128xf32>
    %26 = vector.broadcast %25 : vector<1x128xf32> to vector<16x128xf32>
    %27 = arith.addf %24, %26 : vector<16x128xf32>
    %cst_25 = arith.constant 0.000000e+00 : f32
    %28 = vector.broadcast %cst_25 : f32 to vector<16x128xf32>
    %29 = arith.maximumf %27, %28 : vector<16x128xf32>
    %30 = arith.mulf %14, %29 : vector<16x128xf32>
    %c0_26 = arith.constant 0 : index
    %c0_27 = arith.constant 0 : index
    %31 = vector.load %arg11[%c0_26, %c0_27] : memref<128x128xf32, #tpu.memory_space<vmem>>, vector<128x128xf32>
    %cst_28 = arith.constant dense<0.000000e+00> : vector<16x128xf32>
    %32 = tpu.matmul %30, %31, %cst_28 {dimension_numbers = #tpu.dot_dimension_numbers<[1], [0], [0], [1], [0, 0, 1, 1], [], []>} : vector<16x128xf32>, vector<128x128xf32>, vector<16x128xf32> -> vector<16x128xf32>
    %c0_29 = arith.constant 0 : index
    %c0_30 = arith.constant 0 : index
    %33 = vector.load %arg12[%c0_29, %c0_30] : memref<1x128xf32, #tpu.memory_space<vmem>>, vector<1x128xf32>
    %34 = vector.broadcast %33 : vector<1x128xf32> to vector<16x128xf32>
    %35 = arith.addf %32, %34 : vector<16x128xf32>
    %cst_31 = arith.constant dense<0xFF800000> : vector<16xf32>
    %36 = vector.multi_reduction <maximumf>, %35, %cst_31 [1] : vector<16x128xf32> to vector<16xf32>
    %37 = vector.shape_cast %36 : vector<16xf32> to vector<16x1xf32>
    %38 = vector.broadcast %37 : vector<16x1xf32> to vector<16x128xf32>
    %39 = arith.subf %35, %38 : vector<16x128xf32>
    %40 = math.exp %39 : vector<16x128xf32>
    %cst_32 = arith.constant dense<0.000000e+00> : vector<16xf32>
    %41 = vector.multi_reduction <add>, %40, %cst_32 [1] : vector<16x128xf32> to vector<16xf32>
    %42 = vector.shape_cast %41 : vector<16xf32> to vector<16x1xf32>
    %43 = tpu.reciprocal %42 {approx = true} : vector<16x1xf32> -> vector<16x1xf32>
    %44 = vector.broadcast %43 : vector<16x1xf32> to vector<16x128xf32>
    %45 = arith.mulf %40, %44 : vector<16x128xf32>
    %c0_33 = arith.constant 0 : index
    %c0_34 = arith.constant 0 : index
    %46 = vector.load %arg13[%c0_33, %c0_34] : memref<16x128xf32, #tpu.memory_space<vmem>>, vector<16x128xf32>
    tpu.vector_store %arg13[%c0_33, %c0_34], %45 {strides = array<i32>} : memref<16x128xf32, #tpu.memory_space<vmem>>, vector<16x128xf32>,
    return
  }
  func.func @transform_0(%arg0: i32) -> (i32, i32) {
    %c0_i32 = arith.constant 0 : i32
    %c0_i32_0 = arith.constant 0 : i32
    return %arg0, %c0_i32 : i32, i32
  }
  func.func @transform_1(%arg0: i32) -> (i32, i32) {
    %c0_i32 = arith.constant 0 : i32
    %c0_i32_0 = arith.constant 0 : i32
    return %arg0, %c0_i32 : i32, i32
  }
  func.func @transform_2(%arg0: i32) -> (i32, i32) {
    %c0_i32 = arith.constant 0 : i32
    %c0_i32_0 = arith.constant 0 : i32
    %c0_i32_1 = arith.constant 0 : i32
    return %c0_i32, %c0_i32_0 : i32, i32
  }
  func.func @transform_3(%arg0: i32) -> (i32, i32) {
    %c0_i32 = arith.constant 0 : i32
    %c0_i32_0 = arith.constant 0 : i32
    %c0_i32_1 = arith.constant 0 : i32
    return %c0_i32, %c0_i32_0 : i32, i32
  }
  func.func @transform_4(%arg0: i32) -> (i32, i32) {
    %c0_i32 = arith.constant 0 : i32
    %c0_i32_0 = arith.constant 0 : i32
    %c0_i32_1 = arith.constant 0 : i32
    return %c0_i32, %c0_i32_0 : i32, i32
  }
  func.func @transform_5(%arg0: i32) -> (i32, i32) {
    %c0_i32 = arith.constant 0 : i32
    %c0_i32_0 = arith.constant 0 : i32
    %c0_i32_1 = arith.constant 0 : i32
    return %c0_i32, %c0_i32_0 : i32, i32
  }
  func.func @transform_6(%arg0: i32) -> (i32, i32) {
    %c0_i32 = arith.constant 0 : i32
    %c0_i32_0 = arith.constant 0 : i32
    %c0_i32_1 = arith.constant 0 : i32
    return %c0_i32, %c0_i32_0 : i32, i32
  }
  func.func @transform_7(%arg0: i32) -> (i32, i32) {
    %c0_i32 = arith.constant 0 : i32
    %c0_i32_0 = arith.constant 0 : i32
    %c0_i32_1 = arith.constant 0 : i32
    return %c0_i32, %c0_i32_0 : i32, i32
  }
  func.func @transform_8(%arg0: i32) -> (i32, i32) {
    %c0_i32 = arith.constant 0 : i32
    %c0_i32_0 = arith.constant 0 : i32
    %c0_i32_1 = arith.constant 0 : i32
    return %c0_i32, %c0_i32_0 : i32, i32
  }
  func.func @transform_9(%arg0: i32) -> (i32, i32) {
    %c0_i32 = arith.constant 0 : i32
    %c0_i32_0 = arith.constant 0 : i32
    %c0_i32_1 = arith.constant 0 : i32
    return %c0_i32, %c0_i32_0 : i32, i32
  }
  func.func @transform_10(%arg0: i32) -> (i32, i32) {
    %c0_i32 = arith.constant 0 : i32
    %c0_i32_0 = arith.constant 0 : i32
    %c0_i32_1 = arith.constant 0 : i32
    return %c0_i32, %c0_i32_0 : i32, i32
  }
  func.func @transform_11(%arg0: i32) -> (i32, i32) {
    %c0_i32 = arith.constant 0 : i32
    %c0_i32_0 = arith.constant 0 : i32
    %c0_i32_1 = arith.constant 0 : i32
    return %c0_i32, %c0_i32_0 : i32, i32
  }
  func.func @transform_12(%arg0: i32) -> (i32, i32) {
    %c0_i32 = arith.constant 0 : i32
    %c0_i32_0 = arith.constant 0 : i32
    return %arg0, %c0_i32 : i32, i32
  }
}

</mosaic_0001>

<llo_original>
// kernel: tpu_custom_call.1
$region0: #{tpu_custom_call.1}
  #allocation0 [shape = 'u32[]', space=smem, size = 0x4, offset = 0x4, fixed_abs, tag = 'smem constant byte address 0x4 - core index']
  #allocation1 [shape = 'u32[72,128]{1,0:T(1,128)}', space=vmem, size = 0x9000, scoped, tag = 'internal scratch']
  %s0 = inlined_call_operand.hbm [shape: f32[20,32], index: 0, kind: input, shape index: {}]
  %s1 = inlined_call_operand.hbm [shape: f32[20,64], index: 1, kind: input, shape index: {}]
  %s2 = inlined_call_operand.hbm [shape: f32[32,128], index: 2, kind: input, shape index: {}]
  %s3 = inlined_call_operand.hbm [shape: f32[64,128], index: 3, kind: input, shape index: {}]
  %s4 = inlined_call_operand.vmem [shape: f32[1,128], index: 4, kind: input, shape index: {}]
  %s5 = inlined_call_operand.vmem [shape: f32[1,128], index: 5, kind: input, shape index: {}]
  %s6 = inlined_call_operand.hbm [shape: f32[128,128], index: 6, kind: input, shape index: {}]
  %s7 = inlined_call_operand.hbm [shape: f32[128,128], index: 7, kind: input, shape index: {}]
  %s8 = inlined_call_operand.vmem [shape: f32[1,128], index: 8, kind: input, shape index: {}]
  %s9 = inlined_call_operand.vmem [shape: f32[1,128], index: 9, kind: input, shape index: {}]
  %s10 = inlined_call_operand.hbm [shape: f32[128,128], index: 10, kind: input, shape index: {}]
  %s11 = inlined_call_operand.vmem [shape: f32[1,128], index: 11, kind: input, shape index: {}]
  %s12 = inlined_call_operand.hbm [shape: f32[20,128], index: 12, kind: output, shape index: {}]
  %s13 = sld [smem:[#allocation0]]
  $region109: #{tpu_custom_call.1} parent=0
    _
  %s15 = ssub.s32 1, %s13
  %s16 = scalar_select 0, %s15, %s13
  $region1: #{tpu_custom_call.1} parent=0
    #allocation2 [shape = 'u8[16384]{0}', space=vmem, size = 0x4000, scoped, tag = 'input window, operand 0']
    #allocation3 [shape = 's32[2]{0}', space=sflag, size = 0x8, scoped, tag = 'scoped memory for tpu_custom_call.1']
    #allocation4 [shape = 's32[2]{0}', space=sflag, size = 0x8, scoped, tag = 'scoped memory for tpu_custom_call.1']
    #allocation5 [shape = 'u8[16384]{0}', space=vmem, size = 0x4000, scoped, tag = 'input window, operand 1']
    #allocation6 [shape = 's32[2]{0}', space=sflag, size = 0x8, scoped, tag = 'scoped memory for tpu_custom_call.1']
    #allocation7 [shape = 'u8[16384]{0}', space=vmem, size = 0x4000, scoped, tag = 'input window, operand 2, single buffered']
    #allocation8 [shape = 'u8[32768]{0}', space=vmem, size = 0x8000, scoped, tag = 'input window, operand 3, single buffered']
    #allocation9 [shape = 's32[1]{0}', space=sflag, size = 0x4, scoped, tag = 'scoped memory for tpu_custom_call.1']
    #allocation10 [shape = 'u8[65536]{0}', space=vmem, size = 0x10000, scoped, tag = 'input window, operand 6, single buffered']
    #allocation11 [shape = 'u8[65536]{0}', space=vmem, size = 0x10000, scoped, tag = 'input window, operand 7, single buffered']
    #allocation12 [shape = 's32[1]{0}', space=sflag, size = 0x4, scoped, tag = 'scoped memory for tpu_custom_call.1']
    #allocation13 [shape = 'u8[65536]{0}', space=vmem, size = 0x10000, scoped, tag = 'input window, operand 10, single buffered']
    #allocation14 [shape = 'u8[16384]{0}', space=vmem, size = 0x4000, scoped, tag = 'output window, operand 0']
    %17 = vsyncpa [#allocation3], 0
    %s18 = scalar_lea.sflag [#allocation3], 1
    %19 = vsyncpa %s18, 0
    %20 = vsyncpa [#allocation6], 0
    %s21 = scalar_lea.sflag [#allocation6], 1
    %22 = vsyncpa %s21, 0
    %23 = vsyncpa [#allocation9], 0
    %24 = vsyncpa [#allocation12], 0
    %25 = vsyncpa [#allocation4], 0
    %s26 = scalar_lea.sflag [#allocation4], 1
    %27 = vsyncpa %s26, 0
    loop: start=0, step=1, limit=4
    $region2: #{tpu_custom_call.1} parent=1 // loop_pre_header
      _
    $region3: #{tpu_custom_call.1} parent=1 // loop_header
      %s29 = sphi 0, %s33
      %p30 = scmp.ge.s32.totalorder %s29, 4
      %s39 = sphi 0, %s41
      %s42 = sphi 0, %s39
      %s43 = sphi 0, %s42
      %s59 = sphi 0, %s43
      %s65 = sphi 0, %s67
      %s68 = sphi 0, %s65
      %s69 = sphi 0, %s68
      %s85 = sphi 0, %s69
      %s89 = sphi 0, %s89
      %s91 = sphi 0, %s89
      %s92 = sphi 0, %s91
      %s106 = sphi 0, %s92
      %s110 = sphi 0, %s110
      %s112 = sphi 0, %s110
      %s113 = sphi 0, %s112
      %s127 = sphi 0, %s113
      %s131 = sphi 0, %s131
      %s133 = sphi 0, %s131
      %s134 = sphi 0, %s133
      %s148 = sphi 0, %s134
      %s152 = sphi 0, %s152
      %s154 = sphi 0, %s152
      %s155 = sphi 0, %s154
      %s169 = sphi 0, %s155
      %s173 = sphi 0, %s173
      %s175 = sphi 0, %s173
      %s176 = sphi 0, %s175
      %s190 = sphi 0, %s176
      %s194 = sphi 0, %s194
      %s196 = sphi 0, %s194
      %s197 = sphi 0, %s196
      %s211 = sphi 0, %s197
      %s215 = sphi 0, %s215
      %s217 = sphi 0, %s215
      %s218 = sphi 0, %s217
      %s232 = sphi 0, %s218
      %s236 = sphi 0, %s236
      %s238 = sphi 0, %s236
      %s239 = sphi 0, %s238
      %s253 = sphi 0, %s239
      %s257 = sphi 0, %s257
      %s259 = sphi 0, %s257
      %s260 = sphi 0, %s259
      %s274 = sphi 0, %s260
      %s278 = sphi 0, %s278
      %s280 = sphi 0, %s278
      %s281 = sphi 0, %s280
      %s295 = sphi 0, %s281
      %s301 = sphi 0, %s303
      %s304 = sphi 0, %s301
      %s305 = sphi 0, %s304
      %s321 = sphi 0, %s305
    $region4: #{tpu_custom_call.1} parent=1 // loop_header_branch
      %32 = sbr.rel (%p30) target = $region8
    $region5: #{tpu_custom_call.1} parent=1 // loop_body
      %s34 = ssub.s32 %s29, 1
      %s35 = ssub.s32 %s29, 2
      %s36 = sadd.s32 %s29, 1
      %s37 = ssub.s32 %s29, %s36
      %p38 = scmp.eq.s32.totalorder %s37, 0
      %s40 = sadd.s32 %s39, 1
      %s41 = scalar_select %p38, %s39, %s40
      %p44 = pneg %p38
      %p45 = scmp.eq.s32.totalorder %s29, 1
      %p46 = por %p44, %p45
      %p47 = scmp.ne.s32.totalorder %s39, %s42
      %p48 = scmp.eq.s32.totalorder %s29, 0
      %p49 = por %p47, %p48
      %p50 = scmp.ne.s32.totalorder %s39, %s42
      %p51 = scmp.eq.s32.totalorder %s34, 1
      %p52 = por %p50, %p51
      %p53 = scmp.ne.s32.totalorder %s42, %s43
      %p54 = scmp.eq.s32.totalorder %s34, 0
      %p55 = por %p53, %p54
      %p56 = scmp.ne.s32.totalorder %s42, %s43
      %p57 = scmp.eq.s32.totalorder %s35, 1
      %p58 = por %p56, %p57
      %p60 = scmp.ne.s32.totalorder %s43, %s59
      %p61 = scmp.eq.s32.totalorder %s35, 0
      %p62 = por %p60, %p61
      %s63 = ssub.s32 %s29, %s36
      %p64 = scmp.eq.s32.totalorder %s63, 0
      %s66 = sadd.s32 %s65, 1
      %s67 = scalar_select %p64, %s65, %s66
      %p70 = pneg %p64
      %p71 = scmp.eq.s32.totalorder %s29, 1
      %p72 = por %p70, %p71
      %p73 = scmp.ne.s32.totalorder %s65, %s68
      %p74 = scmp.eq.s32.totalorder %s29, 0
      %p75 = por %p73, %p74
      %p76 = scmp.ne.s32.totalorder %s65, %s68
      %p77 = scmp.eq.s32.totalorder %s34, 1
      %p78 = por %p76, %p77
      %p79 = scmp.ne.s32.totalorder %s68, %s69
      %p80 = scmp.eq.s32.totalorder %s34, 0
      %p81 = por %p79, %p80
      %p82 = scmp.ne.s32.totalorder %s68, %s69
      %p83 = scmp.eq.s32.totalorder %s35, 1
      %p84 = por %p82, %p83
      %p86 = scmp.ne.s32.totalorder %s69, %s85
      %p87 = scmp.eq.s32.totalorder %s35, 0
      %p88 = por %p86, %p87
      %s90 = sadd.s32 %s89, 1
      %p93 = scmp.eq.s32.totalorder %s29, 1
      %p94 = scmp.ne.s32.totalorder %s89, %s91
      %p95 = scmp.eq.s32.totalorder %s29, 0
      %p96 = por %p94, %p95
      %p97 = scmp.ne.s32.totalorder %s89, %s91
      %p98 = scmp.eq.s32.totalorder %s34, 1
      %p99 = por %p97, %p98
      %p100 = scmp.ne.s32.totalorder %s91, %s92
      %p101 = scmp.eq.s32.totalorder %s34, 0
      %p102 = por %p100, %p101
      %p103 = scmp.ne.s32.totalorder %s91, %s92
      %p104 = scmp.eq.s32.totalorder %s35, 1
      %p105 = por %p103, %p104
      %p107 = scmp.ne.s32.totalorder %s92, %s106
      %p108 = scmp.eq.s32.totalorder %s35, 0
      %p109 = por %p107, %p108
      %s111 = sadd.s32 %s110, 1
      %p114 = scmp.eq.s32.totalorder %s29, 1
      %p115 = scmp.ne.s32.totalorder %s110, %s112
      %p116 = scmp.eq.s32.totalorder %s29, 0
      %p117 = por %p115, %p116
      %p118 = scmp.ne.s32.totalorder %s110, %s112
      %p119 = scmp.eq.s32.totalorder %s34, 1
      %p120 = por %p118, %p119
      %p121 = scmp.ne.s32.totalorder %s112, %s113
      %p122 = scmp.eq.s32.totalorder %s34, 0
      %p123 = por %p121, %p122
      %p124 = scmp.ne.s32.totalorder %s112, %s113
      %p125 = scmp.eq.s32.totalorder %s35, 1
      %p126 = por %p124, %p125
      %p128 = scmp.ne.s32.totalorder %s113, %s127
      %p129 = scmp.eq.s32.totalorder %s35, 0
      %p130 = por %p128, %p129
      %s132 = sadd.s32 %s131, 1
      %p135 = scmp.eq.s32.totalorder %s29, 1
      %p136 = scmp.ne.s32.totalorder %s131, %s133
      %p137 = scmp.eq.s32.totalorder %s29, 0
      %p138 = por %p136, %p137
      %p139 = scmp.ne.s32.totalorder %s131, %s133
      %p140 = scmp.eq.s32.totalorder %s34, 1
      %p141 = por %p139, %p140
      %p142 = scmp.ne.s32.totalorder %s133, %s134
      %p143 = scmp.eq.s32.totalorder %s34, 0
      %p144 = por %p142, %p143
      %p145 = scmp.ne.s32.totalorder %s133, %s134
      %p146 = scmp.eq.s32.totalorder %s35, 1
      %p147 = por %p145, %p146
      %p149 = scmp.ne.s32.totalorder %s134, %s148
      %p150 = scmp.eq.s32.totalorder %s35, 0
      %p151 = por %p149, %p150
      %s153 = sadd.s32 %s152, 1
      %p156 = scmp.eq.s32.totalorder %s29, 1
      %p157 = scmp.ne.s32.totalorder %s152, %s154
      %p158 = scmp.eq.s32.totalorder %s29, 0
      %p159 = por %p157, %p158
      %p160 = scmp.ne.s32.totalorder %s152, %s154
      %p161 = scmp.eq.s32.totalorder %s34, 1
      %p162 = por %p160, %p161
      %p163 = scmp.ne.s32.totalorder %s154, %s155
      %p164 = scmp.eq.s32.totalorder %s34, 0
      %p165 = por %p163, %p164
      %p166 = scmp.ne.s32.totalorder %s154, %s155
      %p167 = scmp.eq.s32.totalorder %s35, 1
      %p168 = por %p166, %p167
      %p170 = scmp.ne.s32.totalorder %s155, %s169
      %p171 = scmp.eq.s32.totalorder %s35, 0
      %p172 = por %p170, %p171
      %s174 = sadd.s32 %s173, 1
      %p177 = scmp.eq.s32.totalorder %s29, 1
      %p178 = scmp.ne.s32.totalorder %s173, %s175
      %p179 = scmp.eq.s32.totalorder %s29, 0
      %p180 = por %p178, %p179
      %p181 = scmp.ne.s32.totalorder %s173, %s175
      %p182 = scmp.eq.s32.totalorder %s34, 1
      %p183 = por %p181, %p182
      %p184 = scmp.ne.s32.totalorder %s175, %s176
      %p185 = scmp.eq.s32.totalorder %s34, 0
      %p186 = por %p184, %p185
      %p187 = scmp.ne.s32.totalorder %s175, %s176
      %p188 = scmp.eq.s32.totalorder %s35, 1
      %p189 = por %p187, %p188
      %p191 = scmp.ne.s32.totalorder %s176, %s190
      %p192 = scmp.eq.s32.totalorder %s35, 0
      %p193 = por %p191, %p192
      %s195 = sadd.s32 %s194, 1
      %p198 = scmp.eq.s32.totalorder %s29, 1
      %p199 = scmp.ne.s32.totalorder %s194, %s196
      %p200 = scmp.eq.s32.totalorder %s29, 0
      %p201 = por %p199, %p200
      %p202 = scmp.ne.s32.totalorder %s194, %s196
      %p203 = scmp.eq.s32.totalorder %s34, 1
      %p204 = por %p202, %p203
      %p205 = scmp.ne.s32.totalorder %s196, %s197
      %p206 = scmp.eq.s32.totalorder %s34, 0
      %p207 = por %p205, %p206
      %p208 = scmp.ne.s32.totalorder %s196, %s197
      %p209 = scmp.eq.s32.totalorder %s35, 1
      %p210 = por %p208, %p209
      %p212 = scmp.ne.s32.totalorder %s197, %s211
      %p213 = scmp.eq.s32.totalorder %s35, 0
      %p214 = por %p212, %p213
      %s216 = sadd.s32 %s215, 1
      %p219 = scmp.eq.s32.totalorder %s29, 1
      %p220 = scmp.ne.s32.totalorder %s215, %s217
      %p221 = scmp.eq.s32.totalorder %s29, 0
      %p222 = por %p220, %p221
      %p223 = scmp.ne.s32.totalorder %s215, %s217
      %p224 = scmp.eq.s32.totalorder %s34, 1
      %p225 = por %p223, %p224
      %p226 = scmp.ne.s32.totalorder %s217, %s218
      %p227 = scmp.eq.s32.totalorder %s34, 0
      %p228 = por %p226, %p227
      %p229 = scmp.ne.s32.totalorder %s217, %s218
      %p230 = scmp.eq.s32.totalorder %s35, 1
      %p231 = por %p229, %p230
      %p233 = scmp.ne.s32.totalorder %s218, %s232
      %p234 = scmp.eq.s32.totalorder %s35, 0
      %p235 = por %p233, %p234
      %s237 = sadd.s32 %s236, 1
      %p240 = scmp.eq.s32.totalorder %s29, 1
      %p241 = scmp.ne.s32.totalorder %s236, %s238
      %p242 = scmp.eq.s32.totalorder %s29, 0
      %p243 = por %p241, %p242
      %p244 = scmp.ne.s32.totalorder %s236, %s238
      %p245 = scmp.eq.s32.totalorder %s34, 1
      %p246 = por %p244, %p245
      %p247 = scmp.ne.s32.totalorder %s238, %s239
      %p248 = scmp.eq.s32.totalorder %s34, 0
      %p249 = por %p247, %p248
      %p250 = scmp.ne.s32.totalorder %s238, %s239
      %p251 = scmp.eq.s32.totalorder %s35, 1
      %p252 = por %p250, %p251
      %p254 = scmp.ne.s32.totalorder %s239, %s253
      %p255 = scmp.eq.s32.totalorder %s35, 0
      %p256 = por %p254, %p255
      %s258 = sadd.s32 %s257, 1
      %p261 = scmp.eq.s32.totalorder %s29, 1
      %p262 = scmp.ne.s32.totalorder %s257, %s259
      %p263 = scmp.eq.s32.totalorder %s29, 0
      %p264 = por %p262, %p263
      %p265 = scmp.ne.s32.totalorder %s257, %s259
      %p266 = scmp.eq.s32.totalorder %s34, 1
      %p267 = por %p265, %p266
      %p268 = scmp.ne.s32.totalorder %s259, %s260
      %p269 = scmp.eq.s32.totalorder %s34, 0
      %p270 = por %p268, %p269
      %p271 = scmp.ne.s32.totalorder %s259, %s260
      %p272 = scmp.eq.s32.totalorder %s35, 1
      %p273 = por %p271, %p272
      %p275 = scmp.ne.s32.totalorder %s260, %s274
      %p276 = scmp.eq.s32.totalorder %s35, 0
      %p277 = por %p275, %p276
      %s279 = sadd.s32 %s278, 1
      %p282 = scmp.eq.s32.totalorder %s29, 1
      %p283 = scmp.ne.s32.totalorder %s278, %s280
      %p284 = scmp.eq.s32.totalorder %s29, 0
      %p285 = por %p283, %p284
      %p286 = scmp.ne.s32.totalorder %s278, %s280
      %p287 = scmp.eq.s32.totalorder %s34, 1
      %p288 = por %p286, %p287
      %p289 = scmp.ne.s32.totalorder %s280, %s281
      %p290 = scmp.eq.s32.totalorder %s34, 0
      %p291 = por %p289, %p290
      %p292 = scmp.ne.s32.totalorder %s280, %s281
      %p293 = scmp.eq.s32.totalorder %s35, 1
      %p294 = por %p292, %p293
      %p296 = scmp.ne.s32.totalorder %s281, %s295
      %p297 = scmp.eq.s32.totalorder %s35, 0
      %p298 = por %p296, %p297
      %s299 = ssub.s32 %s29, %s36
      %p300 = scmp.eq.s32.totalorder %s299, 0
      %s302 = sadd.s32 %s301, 1
      %s303 = scalar_select %p300, %s301, %s302
      %p306 = pneg %p300
      %p307 = scmp.eq.s32.totalorder %s29, 1
      %p308 = por %p306, %p307
      %p309 = scmp.ne.s32.totalorder %s301, %s304
      %p310 = scmp.eq.s32.totalorder %s29, 0
      %p311 = por %p309, %p310
      %p312 = scmp.ne.s32.totalorder %s301, %s304
      %p313 = scmp.eq.s32.totalorder %s34, 1
      %p314 = por %p312, %p313
      %p315 = scmp.ne.s32.totalorder %s304, %s305
      %p316 = scmp.eq.s32.totalorder %s34, 0
      %p317 = por %p315, %p316
      %p318 = scmp.ne.s32.totalorder %s304, %s305
      %p319 = scmp.eq.s32.totalorder %s35, 1
      %p320 = por %p318, %p319
      %p322 = scmp.ne.s32.totalorder %s305, %s321
      %p323 = scmp.eq.s32.totalorder %s35, 0
      %p324 = por %p322, %p323
      %p325 = scmp.le.s32.totalorder 1, %s29
      %p326 = scmp.lt.s32.totalorder %s29, 3
      %p327 = pnand %p325, %p326
      %p328 = pneg %p327
      // Predicated region
      $region9: #{tpu_custom_call.1} parent=5 // pred_check
        _
      $region10: #{tpu_custom_call.1} parent=5 // pred_check_branch
        %330 = sbr.rel (%p327) target = $region12
      $region11: #{tpu_custom_call.1} parent=5 // pred_region
        %s331 = ssub.s32 %s29, 1
        // Predicated region
        $region13: #{tpu_custom_call.1} parent=11 // pred_check
          %p332 = pneg %p102
        $region14: #{tpu_custom_call.1} parent=11 // pred_check_branch
          %334 = sbr.rel (%p332) target = $region16
        $region15: #{tpu_custom_call.1} parent=11 // pred_region
          %336 = vsyncadd [#allocation6], 0
          %s337 = sshll.u32 %s2, 4
          %s338 = int_to_ptr.hbm [resolvable:$true] %s337
          %s339 = sshll.u32 [#allocation7], 4
          %s340 = int_to_ptr.vmem [resolvable:$true] %s339
          %345 = dma.hbm_to_vmem [thread:$0]  %s338, 512, %s340, [#allocation6], 128, 128, 8
        $region16: #{tpu_custom_call.1} parent=11 // pred_fallthru
          _
        // Predicated region
        $region17: #{tpu_custom_call.1} parent=11 // pred_check
          %p346 = pneg %p123
        $region18: #{tpu_custom_call.1} parent=11 // pred_check_branch
          %348 = sbr.rel (%p346) target = $region20
        $region19: #{tpu_custom_call.1} parent=11 // pred_region
          %350 = vsyncadd [#allocation9], 0
          %s351 = sshll.u32 %s3, 4
          %s352 = int_to_ptr.hbm [resolvable:$true] %s351
          %s353 = sshll.u32 [#allocation8], 4
          %s354 = int_to_ptr.vmem [resolvable:$true] %s353
          %359 = dma.hbm_to_vmem [thread:$0]  %s352, 1024, %s354, [#allocation9], 128, 128, 8
        $region20: #{tpu_custom_call.1} parent=11 // pred_fallthru
          _
        // Predicated region
        $region21: #{tpu_custom_call.1} parent=11 // pred_check
          %p360 = pneg %p144
        $region22: #{tpu_custom_call.1} parent=11 // pred_check_branch
          %362 = sbr.rel (%p360) target = $region24
        $region23: #{tpu_custom_call.1} parent=11 // pred_region
          _
        $region24: #{tpu_custom_call.1} parent=11 // pred_fallthru
          _
        // Predicated region
        $region25: #{tpu_custom_call.1} parent=11 // pred_check
          %p363 = pneg %p165
        $region26: #{tpu_custom_call.1} parent=11 // pred_check_branch
          %365 = sbr.rel (%p363) target = $region28
        $region27: #{tpu_custom_call.1} parent=11 // pred_region
          _
        $region28: #{tpu_custom_call.1} parent=11 // pred_fallthru
          _
        // Predicated region
        $region29: #{tpu_custom_call.1} parent=11 // pred_check
          %p366 = pneg %p186
        $region30: #{tpu_custom_call.1} parent=11 // pred_check_branch
          %368 = sbr.rel (%p366) target = $region32
        $region31: #{tpu_custom_call.1} parent=11 // pred_region
          %370 = vsyncadd [#allocation9], 0
          %s371 = sshll.u32 %s6, 4
          %s372 = int_to_ptr.hbm [resolvable:$true] %s371
          %s373 = sshll.u32 [#allocation10], 4
          %s374 = int_to_ptr.vmem [resolvable:$true] %s373
          %379 = dma.hbm_to_vmem [thread:$0]  %s372, 2048, %s374, [#allocation9], 128, 128, 8
        $region32: #{tpu_custom_call.1} parent=11 // pred_fallthru
          _
        // Predicated region
        $region33: #{tpu_custom_call.1} parent=11 // pred_check
          %p380 = pneg %p207
        $region34: #{tpu_custom_call.1} parent=11 // pred_check_branch
          %382 = sbr.rel (%p380) target = $region36
        $region35: #{tpu_custom_call.1} parent=11 // pred_region
          %384 = vsyncadd [#allocation12], 0
          %s385 = sshll.u32 %s7, 4
          %s386 = int_to_ptr.hbm [resolvable:$true] %s385
          %s387 = sshll.u32 [#allocation11], 4
          %s388 = int_to_ptr.vmem [resolvable:$true] %s387
          %393 = dma.hbm_to_vmem [thread:$0]  %s386, 2048, %s388, [#allocation12], 128, 128, 8
        $region36: #{tpu_custom_call.1} parent=11 // pred_fallthru
          _
        // Predicated region
        $region37: #{tpu_custom_call.1} parent=11 // pred_check
          %p394 = pneg %p228
        $region38: #{tpu_custom_call.1} parent=11 // pred_check_branch
          %396 = sbr.rel (%p394) target = $region40
        $region39: #{tpu_custom_call.1} parent=11 // pred_region
          _
        $region40: #{tpu_custom_call.1} parent=11 // pred_fallthru
          _
        // Predicated region
        $region41: #{tpu_custom_call.1} parent=11 // pred_check
          %p397 = pneg %p249
        $region42: #{tpu_custom_call.1} parent=11 // pred_check_branch
          %399 = sbr.rel (%p397) target = $region44
        $region43: #{tpu_custom_call.1} parent=11 // pred_region
          _
        $region44: #{tpu_custom_call.1} parent=11 // pred_fallthru
          _
        // Predicated region
        $region45: #{tpu_custom_call.1} parent=11 // pred_check
          %p400 = pneg %p270
        $region46: #{tpu_custom_call.1} parent=11 // pred_check_branch
          %402 = sbr.rel (%p400) target = $region48
        $region47: #{tpu_custom_call.1} parent=11 // pred_region
          %404 = vsyncadd [#allocation12], 0
          %s405 = sshll.u32 %s10, 4
          %s406 = int_to_ptr.hbm [resolvable:$true] %s405
          %s407 = sshll.u32 [#allocation13], 4
          %s408 = int_to_ptr.vmem [resolvable:$true] %s407
          %413 = dma.hbm_to_vmem [thread:$0]  %s406, 2048, %s408, [#allocation12], 128, 128, 8
        $region48: #{tpu_custom_call.1} parent=11 // pred_fallthru
          _
        // Predicated region
        $region49: #{tpu_custom_call.1} parent=11 // pred_check
          %p414 = pneg %p291
        $region50: #{tpu_custom_call.1} parent=11 // pred_check_branch
          %416 = sbr.rel (%p414) target = $region52
        $region51: #{tpu_custom_call.1} parent=11 // pred_region
          _
        $region52: #{tpu_custom_call.1} parent=11 // pred_fallthru
          _
      $region12: #{tpu_custom_call.1} parent=5 // pred_fallthru
        _
      %p417 = scmp.lt.s32.totalorder %s29, 2
      // Predicated region
      $region53: #{tpu_custom_call.1} parent=5 // pred_check
        %p418 = pneg %p417
      $region54: #{tpu_custom_call.1} parent=5 // pred_check_branch
        %420 = sbr.rel (%p418) target = $region56
      $region55: #{tpu_custom_call.1} parent=5 // pred_region
        // Predicated region
        $region57: #{tpu_custom_call.1} parent=55 // pred_check
          %p421 = pneg %p49
        $region58: #{tpu_custom_call.1} parent=55 // pred_check_branch
          %423 = sbr.rel (%p421) target = $region60
        $region59: #{tpu_custom_call.1} parent=55 // pred_region
          %s424 = sand.u32 %s39, 1
          %s425 = scalar_lea.sflag [#allocation3], %s424
          %s426 = sand.u32 %s39, 1
          %s427 = smul.addr %s426, 16
          %s428 = scalar_lea.vmem [#allocation2], %s427
          %s429 = smul.u32 2, %s29
          %s430 = ssub.s32 3, %s429
          %p431 = scmp.lt.s32.totalorder %s430, 2
          %s432 = scalar_select %p431, %s430, 2
          %s433 = smul.u32 8, %s432
          %s434 = ssub.s32 16, %s433
          %s435 = sshll.u32 %s434, 4
          %436 = vsyncadd %s425, %s435
          %p437 = scmp.ne.s32.totalorder 0, %s433
          %s438 = smul.addr %s429, 8
          %s439 = scalar_lea.hbm %s0, %s438
          %s440 = smul.u32 8, %s432
          %s441 = sshll.u32 %s439, 4
          %s442 = int_to_ptr.hbm [resolvable:$true] %s441
          %s443 = sshll.u32 %s428, 4
          %s444 = int_to_ptr.vmem [resolvable:$true] %s443
          %s445 = sshll.u32 %s440, 4
          %449 = dma.hbm_to_vmem [thread:$0]  (%p437), %s442, %s445, %s444, %s425, 128, 128, 8
        $region60: #{tpu_custom_call.1} parent=55 // pred_fallthru
          _
        // Predicated region
        $region61: #{tpu_custom_call.1} parent=55 // pred_check
          %p450 = pneg %p75
        $region62: #{tpu_custom_call.1} parent=55 // pred_check_branch
          %452 = sbr.rel (%p450) target = $region64
        $region63: #{tpu_custom_call.1} parent=55 // pred_region
          %s453 = sand.u32 %s29, 1
          %s454 = scalar_lea.sflag [#allocation6], %s453
          %s455 = sand.u32 %s65, 1
          %s456 = smul.addr %s455, 16
          %s457 = scalar_lea.vmem [#allocation5], %s456
          %s458 = smul.u32 2, %s29
          %s459 = ssub.s32 3, %s458
          %p460 = scmp.lt.s32.totalorder %s459, 2
          %s461 = scalar_select %p460, %s459, 2
          %s462 = smul.u32 8, %s461
          %s463 = ssub.s32 16, %s462
          %s464 = sshll.u32 %s463, 4
          %465 = vsyncadd %s454, %s464
          %p466 = scmp.ne.s32.totalorder 0, %s462
          %s467 = smul.addr %s458, 8
          %s468 = scalar_lea.hbm %s1, %s467
          %s469 = smul.u32 8, %s461
          %s470 = sshll.u32 %s468, 4
          %s471 = int_to_ptr.hbm [resolvable:$true] %s470
          %s472 = sshll.u32 %s457, 4
          %s473 = int_to_ptr.vmem [resolvable:$true] %s472
          %s474 = sshll.u32 %s469, 4
          %478 = dma.hbm_to_vmem [thread:$0]  (%p466), %s471, %s474, %s473, %s454, 128, 128, 8
        $region64: #{tpu_custom_call.1} parent=55 // pred_fallthru
          _
      $region56: #{tpu_custom_call.1} parent=5 // pred_fallthru
        _
      %p479 = scmp.le.s32.totalorder 1, %s29
      %p480 = scmp.lt.s32.totalorder %s29, 3
      %p481 = pnand %p479, %p480
      %p482 = pneg %p481
      // Predicated region
      $region65: #{tpu_custom_call.1} parent=5 // pred_check
        _
      $region66: #{tpu_custom_call.1} parent=5 // pred_check_branch
        %484 = sbr.rel (%p481) target = $region68
      $region67: #{tpu_custom_call.1} parent=5 // pred_region
        %s485 = ssub.s32 %s29, 1
        %s486 = sand.u32 %s42, 1
        %s487 = scalar_lea.sflag [#allocation3], %s486
        %s488 = sand.u32 %s42, 1
        %s489 = smul.addr %s488, 16
        %s490 = scalar_lea.vmem [#allocation2], %s489
        // Predicated region
        $region69: #{tpu_custom_call.1} parent=67 // pred_check
          %p491 = pneg %p55
        $region70: #{tpu_custom_call.1} parent=67 // pred_check_branch
          %493 = sbr.rel (%p491) target = $region72
        $region71: #{tpu_custom_call.1} parent=67 // pred_region
          %495 = dma.done %s487, 256
        $region72: #{tpu_custom_call.1} parent=67 // pred_fallthru
          _
        %s496 = sand.u32 %s34, 1
        %s497 = scalar_lea.sflag [#allocation6], %s496
        %s498 = sand.u32 %s68, 1
        %s499 = smul.addr %s498, 16
        %s500 = scalar_lea.vmem [#allocation5], %s499
        // Predicated region
        $region73: #{tpu_custom_call.1} parent=67 // pred_check
          %p501 = pneg %p81
        $region74: #{tpu_custom_call.1} parent=67 // pred_check_branch
          %503 = sbr.rel (%p501) target = $region76
        $region75: #{tpu_custom_call.1} parent=67 // pred_region
          %505 = dma.done %s497, 256
        $region76: #{tpu_custom_call.1} parent=67 // pred_fallthru
          _
        // Predicated region
        $region77: #{tpu_custom_call.1} parent=67 // pred_check
          %p506 = pneg %p102
        $region78: #{tpu_custom_call.1} parent=67 // pred_check_branch
          %508 = sbr.rel (%p506) target = $region80
        $region79: #{tpu_custom_call.1} parent=67 // pred_region
          %510 = dma.done [#allocation6], 512
        $region80: #{tpu_custom_call.1} parent=67 // pred_fallthru
          _
        // Predicated region
        $region81: #{tpu_custom_call.1} parent=67 // pred_check
          %p511 = pneg %p123
        $region82: #{tpu_custom_call.1} parent=67 // pred_check_branch
          %513 = sbr.rel (%p511) target = $region84
        $region83: #{tpu_custom_call.1} parent=67 // pred_region
          %515 = dma.done [#allocation9], 1024
        $region84: #{tpu_custom_call.1} parent=67 // pred_fallthru
          _
        // Predicated region
        $region85: #{tpu_custom_call.1} parent=67 // pred_check
          %p516 = pneg %p186
        $region86: #{tpu_custom_call.1} parent=67 // pred_check_branch
          %518 = sbr.rel (%p516) target = $region88
        $region87: #{tpu_custom_call.1} parent=67 // pred_region
          %520 = dma.done [#allocation9], 2048
        $region88: #{tpu_custom_call.1} parent=67 // pred_fallthru
          _
        // Predicated region
        $region89: #{tpu_custom_call.1} parent=67 // pred_check
          %p521 = pneg %p207
        $region90: #{tpu_custom_call.1} parent=67 // pred_check_branch
          %523 = sbr.rel (%p521) target = $region92
        $region91: #{tpu_custom_call.1} parent=67 // pred_region
          %525 = dma.done [#allocation12], 2048
        $region92: #{tpu_custom_call.1} parent=67 // pred_fallthru
          _
        // Predicated region
        $region93: #{tpu_custom_call.1} parent=67 // pred_check
          %p526 = pneg %p270
        $region94: #{tpu_custom_call.1} parent=67 // pred_check_branch
          %528 = sbr.rel (%p526) target = $region96
        $region95: #{tpu_custom_call.1} parent=67 // pred_region
          %530 = dma.done [#allocation12], 2048
        $region96: #{tpu_custom_call.1} parent=67 // pred_fallthru
          _
        %s531 = sand.u32 %s42, 1
        %s532 = scalar_lea.sflag [#allocation3], %s531
        %s533 = sand.u32 %s42, 1
        %s534 = smul.addr %s533, 16
        %s535 = scalar_lea.vmem [#allocation2], %s534
        %p536 = pneg %p55
        %p537 = pneg %p52
        %s538 = sand.u32 %s34, 1
        %s539 = scalar_lea.sflag [#allocation6], %s538
        %s540 = sand.u32 %s68, 1
        %s541 = smul.addr %s540, 16
        %s542 = scalar_lea.vmem [#allocation5], %s541
        %p543 = pneg %p81
        %p544 = pneg %p78
        %p545 = pneg %p102
        %p546 = pneg %p99
        %p547 = pneg %p123
        %p548 = pneg %p120
        %p549 = pneg %p144
        %p550 = pneg %p141
        %p551 = pneg %p165
        %p552 = pneg %p162
        %p553 = pneg %p186
        %p554 = pneg %p183
        %p555 = pneg %p207
        %p556 = pneg %p204
        %p557 = pneg %p228
        %p558 = pneg %p225
        %p559 = pneg %p249
        %p560 = pneg %p246
        %p561 = pneg %p270
        %p562 = pneg %p267
        %p563 = pneg %p291
        %p564 = pneg %p288
        %p565 = pneg %p317
        %p566 = pneg %p314
        %s567 = sand.u32 %s304, 1
        %s568 = scalar_lea.sflag [#allocation4], %s567
        %s569 = sand.u32 %s304, 1
        %s570 = smul.addr %s569, 16
        %s571 = scalar_lea.vmem [#allocation14], %s570
        %s572 = smul.u32 2, %s34
        %s573 = ssub.s32 3, %s572
        %p574 = scmp.lt.s32.totalorder %s573, 2
        %s575 = scalar_select %p574, %s573, 2
        %s576 = smul.u32 8, %s575
        %s577 = smul.u32 2, %s34
        %s578 = ssub.s32 3, %s577
        %p579 = scmp.lt.s32.totalorder %s578, 2
        %s580 = scalar_select %p579, %s578, 2
        %s581 = smul.u32 8, %s580
        %s582 = smul.u32 2, %s34
        %s583 = ssub.s32 3, %s582
        %p584 = scmp.lt.s32.totalorder %s583, 2
        %s585 = scalar_select %p584, %s583, 2
        %s586 = smul.u32 8, %s585
        %v587 = vld [vmem:[%s490] sm:$0xff]
        %v588 = vld [vmem:[%s490 + $0x8] sm:$0xff]
        %v589 = vld [vmem:[#allocation7] sm:$0xff]
        %v590 = vld [vmem:[#allocation7 + $0x8] sm:$0xff]
        %v591 = vld [vmem:[#allocation7 + $0x10] sm:$0xff]
        %v592 = vld [vmem:[#allocation7 + $0x18] sm:$0xff]
        %v593 = vld [vmem:[%s4] sm:$0x1]
        %v595 = vperm.slane %v593, 0
        %vm597 = vcmask 261120
        %v599 = vsel %vm597, %v587, 0
        %v602 = vsel %vm597, %v588, 0
        %604 = vmatpush.msra.mxu0 0.0
        %605 = vmatpush.msra.mxu0 0.0
        %606 = vmatpush.msra.mxu0 0.0
        %607 = vmatpush.msra.mxu0 0.0
        %608 = vmatpush.msra.mxu0 0.0
        %609 = vmatpush.msra.mxu0 0.0
        %610 = vmatpush.msra.mxu0 0.0
        %611 = vmatpush.msra.mxu0 0.0
        %612 = vmatpush.msra.mxu0 0.0
        %613 = vmatpush.msra.mxu0 0.0
        %614 = vmatpush.msra.mxu0 0.0
        %615 = vmatpush.msra.mxu0 0.0
        %616 = vmatpush.msra.mxu0 %v592
        %617 = vmatpush.msra.mxu0 %v591
        %618 = vmatpush.msra.mxu0 %v590
        %619 = vmatpush.msra.mxu0 %v589
        %620 = vmatmul.f32.gmra.mxu0 %v599
        %v621 = vpop.f32.mrf.mxu0
        %v622 = vadd.f32 %v595, %v621
        %623 = vmatmul.f32.gmra.mxu0 %v602
        %v624 = vpop.f32.mrf.mxu0
        %v625 = vadd.f32 %v595, %v624
        %626 = vdwg.mxu0
        %v627 = vmax.f32 %v622, 0.0
        %v628 = vmax.f32 %v625, 0.0
        %v629 = vld [vmem:[#allocation10] sm:$0xff]
        %v630 = vld [vmem:[#allocation10 + $0x8] sm:$0xff]
        %v631 = vld [vmem:[#allocation10 + $0x10] sm:$0xff]
        %v632 = vld [vmem:[#allocation10 + $0x18] sm:$0xff]
        %v633 = vld [vmem:[#allocation10 + $0x20] sm:$0xff]
        %v634 = vld [vmem:[#allocation10 + $0x28] sm:$0xff]
        %v635 = vld [vmem:[#allocation10 + $0x30] sm:$0xff]
        %v636 = vld [vmem:[#allocation10 + $0x38] sm:$0xff]
        %v637 = vld [vmem:[#allocation10 + $0x40] sm:$0xff]
        %v638 = vld [vmem:[#allocation10 + $0x48] sm:$0xff]
        %v639 = vld [vmem:[#allocation10 + $0x50] sm:$0xff]
        %v640 = vld [vmem:[#allocation10 + $0x58] sm:$0xff]
        %v641 = vld [vmem:[#allocation10 + $0x60] sm:$0xff]
        %v642 = vld [vmem:[#allocation10 + $0x68] sm:$0xff]
        %v643 = vld [vmem:[#allocation10 + $0x70] sm:$0xff]
        %v644 = vld [vmem:[#allocation10 + $0x78] sm:$0xff]
        %v645 = vld [vmem:[%s8] sm:$0x1]
        %v647 = vperm.slane %v645, 0
        %649 = vmatpush.msra.mxu0 %v644
        %650 = vmatpush.msra.mxu0 %v643
        %651 = vmatpush.msra.mxu0 %v642
        %652 = vmatpush.msra.mxu0 %v641
        %653 = vmatpush.msra.mxu0 %v640
        %654 = vmatpush.msra.mxu0 %v639
        %655 = vmatpush.msra.mxu0 %v638
        %656 = vmatpush.msra.mxu0 %v637
        %657 = vmatpush.msra.mxu0 %v636
        %658 = vmatpush.msra.mxu0 %v635
        %659 = vmatpush.msra.mxu0 %v634
        %660 = vmatpush.msra.mxu0 %v633
        %661 = vmatpush.msra.mxu0 %v632
        %662 = vmatpush.msra.mxu0 %v631
        %663 = vmatpush.msra.mxu0 %v630
        %664 = vmatpush.msra.mxu0 %v629
        %665 = vmatmul.f32.gmra.mxu0 %v627
        %v666 = vpop.f32.mrf.mxu0
        %v667 = vadd.f32 %v647, %v666
        %668 = vmatmul.f32.gmra.mxu0 %v628
        %v669 = vpop.f32.mrf.mxu0
        %v670 = vadd.f32 %v647, %v669
        %671 = vdwg.mxu0
        %v672 = vmax.f32 %v667, 0.0
        %v673 = vmax.f32 %v670, 0.0
        %v674 = vld [vmem:[%s500] sm:$0xff]
        %v675 = vld [vmem:[%s500 + $0x8] sm:$0xff]
        %v676 = vld [vmem:[#allocation8] sm:$0xff]
        %v677 = vld [vmem:[#allocation8 + $0x8] sm:$0xff]
        %v678 = vld [vmem:[#allocation8 + $0x10] sm:$0xff]
        %v679 = vld [vmem:[#allocation8 + $0x18] sm:$0xff]
        %v680 = vld [vmem:[#allocation8 + $0x20] sm:$0xff]
        %v681 = vld [vmem:[#allocation8 + $0x28] sm:$0xff]
        %v682 = vld [vmem:[#allocation8 + $0x30] sm:$0xff]
        %v683 = vld [vmem:[#allocation8 + $0x38] sm:$0xff]
        %v684 = vld [vmem:[%s5] sm:$0x1]
        %v686 = vperm.slane %v684, 0
        %vm688 = vcmask 523264
        %v690 = vsel %vm688, %v674, 0
        %v693 = vsel %vm688, %v675, 0
        %695 = vmatpush.msra.mxu0 0.0
        %696 = vmatpush.msra.mxu0 0.0
        %697 = vmatpush.msra.mxu0 0.0
        %698 = vmatpush.msra.mxu0 0.0
        %699 = vmatpush.msra.mxu0 0.0
        %700 = vmatpush.msra.mxu0 0.0
        %701 = vmatpush.msra.mxu0 0.0
        %702 = vmatpush.msra.mxu0 0.0
        %703 = vmatpush.msra.mxu0 %v683
        %704 = vmatpush.msra.mxu0 %v682
        %705 = vmatpush.msra.mxu0 %v681
        %706 = vmatpush.msra.mxu0 %v680
        %707 = vmatpush.msra.mxu0 %v679
        %708 = vmatpush.msra.mxu0 %v678
        %709 = vmatpush.msra.mxu0 %v677
        %710 = vmatpush.msra.mxu0 %v676
        %711 = vmatmul.f32.gmra.mxu0 %v690
        %v712 = vpop.f32.mrf.mxu0
        %v713 = vadd.f32 %v686, %v712
        %714 = vmatmul.f32.gmra.mxu0 %v693
        %v715 = vpop.f32.mrf.mxu0
        %v716 = vadd.f32 %v686, %v715
        %717 = vdwg.mxu0
        %v718 = vmax.f32 %v713, 0.0
        %v719 = vmax.f32 %v716, 0.0
        %v720 = vld [vmem:[#allocation11] sm:$0xff]
        %v721 = vld [vmem:[#allocation11 + $0x8] sm:$0xff]
        %v722 = vld [vmem:[#allocation11 + $0x10] sm:$0xff]
        %v723 = vld [vmem:[#allocation11 + $0x18] sm:$0xff]
        %v724 = vld [vmem:[#allocation11 + $0x20] sm:$0xff]
        %v725 = vld [vmem:[#allocation11 + $0x28] sm:$0xff]
        %v726 = vld [vmem:[#allocation11 + $0x30] sm:$0xff]
        %v727 = vld [vmem:[#allocation11 + $0x38] sm:$0xff]
        %v728 = vld [vmem:[#allocation11 + $0x40] sm:$0xff]
        %v729 = vld [vmem:[#allocation11 + $0x48] sm:$0xff]
        %v730 = vld [vmem:[#allocation11 + $0x50] sm:$0xff]
        %v731 = vld [vmem:[#allocation11 + $0x58] sm:$0xff]
        %v732 = vld [vmem:[#allocation11 + $0x60] sm:$0xff]
        %v733 = vld [vmem:[#allocation11 + $0x68] sm:$0xff]
        %v734 = vld [vmem:[#allocation11 + $0x70] sm:$0xff]
        %v735 = vld [vmem:[#allocation11 + $0x78] sm:$0xff]
        %v736 = vld [vmem:[%s9] sm:$0x1]
        %v738 = vperm.slane %v736, 0
        %740 = vmatpush.msra.mxu0 %v735
        %741 = vmatpush.msra.mxu0 %v734
        %742 = vmatpush.msra.mxu0 %v733
        %743 = vmatpush.msra.mxu0 %v732
        %744 = vmatpush.msra.mxu0 %v731
        %745 = vmatpush.msra.mxu0 %v730
        %746 = vmatpush.msra.mxu0 %v729
        %747 = vmatpush.msra.mxu0 %v728
        %748 = vmatpush.msra.mxu0 %v727
        %749 = vmatpush.msra.mxu0 %v726
        %750 = vmatpush.msra.mxu0 %v725
        %751 = vmatpush.msra.mxu0 %v724
        %752 = vmatpush.msra.mxu0 %v723
        %753 = vmatpush.msra.mxu0 %v722
        %754 = vmatpush.msra.mxu0 %v721
        %755 = vmatpush.msra.mxu0 %v720
        %756 = vmatmul.f32.gmra.mxu0 %v718
        %v757 = vpop.f32.mrf.mxu0
        %v758 = vadd.f32 %v738, %v757
        %759 = vmatmul.f32.gmra.mxu0 %v719
        %v760 = vpop.f32.mrf.mxu0
        %v761 = vadd.f32 %v738, %v760
        %762 = vdwg.mxu0
        %v763 = vmax.f32 %v758, 0.0
        %v764 = vmax.f32 %v761, 0.0
        %v765 = vmul.f32 %v672, %v763
        %v766 = vmul.f32 %v673, %v764
        %v767 = vld [vmem:[#allocation13] sm:$0xff]
        %v768 = vld [vmem:[#allocation13 + $0x8] sm:$0xff]
        %v769 = vld [vmem:[#allocation13 + $0x10] sm:$0xff]
        %v770 = vld [vmem:[#allocation13 + $0x18] sm:$0xff]
        %v771 = vld [vmem:[#allocation13 + $0x20] sm:$0xff]
        %v772 = vld [vmem:[#allocation13 + $0x28] sm:$0xff]
        %v773 = vld [vmem:[#allocation13 + $0x30] sm:$0xff]
        %v774 = vld [vmem:[#allocation13 + $0x38] sm:$0xff]
        %v775 = vld [vmem:[#allocation13 + $0x40] sm:$0xff]
        %v776 = vld [vmem:[#allocation13 + $0x48] sm:$0xff]
        %v777 = vld [vmem:[#allocation13 + $0x50] sm:$0xff]
        %v778 = vld [vmem:[#allocation13 + $0x58] sm:$0xff]
        %v779 = vld [vmem:[#allocation13 + $0x60] sm:$0xff]
        %v780 = vld [vmem:[#allocation13 + $0x68] sm:$0xff]
        %v781 = vld [vmem:[#allocation13 + $0x70] sm:$0xff]
        %v782 = vld [vmem:[#allocation13 + $0x78] sm:$0xff]
        %v783 = vld [vmem:[%s11] sm:$0x1]
        %v785 = vperm.slane %v783, 0
        %787 = vmatpush.msra.mxu0 %v782
        %788 = vmatpush.msra.mxu0 %v781
        %789 = vmatpush.msra.mxu0 %v780
        %790 = vmatpush.msra.mxu0 %v779
        %791 = vmatpush.msra.mxu0 %v778
        %792 = vmatpush.msra.mxu0 %v777
        %793 = vmatpush.msra.mxu0 %v776
        %794 = vmatpush.msra.mxu0 %v775
        %795 = vmatpush.msra.mxu0 %v774
        %796 = vmatpush.msra.mxu0 %v773
        %797 = vmatpush.msra.mxu0 %v772
        %798 = vmatpush.msra.mxu0 %v771
        %799 = vmatpush.msra.mxu0 %v770
        %800 = vmatpush.msra.mxu0 %v769
        %801 = vmatpush.msra.mxu0 %v768
        %802 = vmatpush.msra.mxu0 %v767
        %803 = vmatmul.f32.gmra.mxu0 %v765
        %v804 = vpop.f32.mrf.mxu0
        %v805 = vadd.f32 %v785, %v804
        %806 = vmatmul.f32.gmra.mxu0 %v766
        %v807 = vpop.f32.mrf.mxu0
        %v808 = vadd.f32 %v785, %v807
        %809 = vdwg.mxu0
        %810 = vmax.xlane.f32.xlu0 %v805
        %v811 = vpop.xlane.xlu0 %810
        %812 = vmax.xlane.f32.xlu0 %v808
        %v813 = vpop.xlane.xlu0 %812
        %v814 = vsub.f32 %v805, %v811
        %v815 = vsub.f32 %v808, %v813
        %v816 = vmul.f32 %v814, 1.442695
        %v817 = vpow.pop %v816
        %v818 = vmul.f32 %v815, 1.442695
        %v819 = vpow.pop %v818
        %820 = vadd.xlane.f32.xlu0 %v817
        %v821 = vpop.xlane.xlu0 %820
        %822 = vadd.xlane.f32.xlu0 %v819
        %v823 = vpop.xlane.xlu0 %822
        %v824 = vrcp.pop %v821
        %v825 = vrcp.pop %v823
        %v826 = vmul.f32 %v817, %v824
        %v827 = vmul.f32 %v819, %v825
        %828 = vst [vmem:[%s571] sm:$0xff] %v826
        %829 = vst [vmem:[%s571 + $0x8] sm:$0xff] %v827
        %s830 = sand.u32 %s304, 1
        %s831 = scalar_lea.sflag [#allocation4], %s830
        %s832 = sand.u32 %s304, 1
        %s833 = smul.addr %s832, 16
        %s834 = scalar_lea.vmem [#allocation14], %s833
        // Predicated region
        $region97: #{tpu_custom_call.1} parent=67 // pred_check
          %p835 = pneg %p314
        $region98: #{tpu_custom_call.1} parent=67 // pred_check_branch
          %837 = sbr.rel (%p835) target = $region100
        $region99: #{tpu_custom_call.1} parent=67 // pred_region
          %s838 = smul.u32 2, %s34
          %s839 = ssub.s32 3, %s838
          %p840 = scmp.lt.s32.totalorder %s839, 2
          %s841 = scalar_select %p840, %s839, 2
          %s842 = smul.u32 8, %s841
          %s843 = ssub.s32 16, %s842
          %s844 = sshll.u32 %s843, 4
          %845 = vsyncadd %s831, %s844
          %p846 = scmp.ne.s32.totalorder 0, %s842
          %s847 = smul.addr %s838, 8
          %s848 = scalar_lea.hbm %s12, %s847
          %s849 = smul.u32 8, %s841
          %s850 = sshll.u32 %s834, 4
          %s851 = int_to_ptr.vmem [resolvable:$true] %s850
          %s852 = sshll.u32 %s848, 4
          %s853 = int_to_ptr.hbm [resolvable:$true] %s852
          %s854 = sshll.u32 %s849, 4
          %858 = dma.vmem_to_hbm [thread:$0]  (%p846), %s851, %s854, %s853, %s831, 128, 128, 8
        $region100: #{tpu_custom_call.1} parent=67 // pred_fallthru
          _
      $region68: #{tpu_custom_call.1} parent=5 // pred_fallthru
        _
      %p859 = scmp.le.s32.totalorder 2, %s29
      // Predicated region
      $region101: #{tpu_custom_call.1} parent=5 // pred_check
        %p860 = pneg %p859
      $region102: #{tpu_custom_call.1} parent=5 // pred_check_branch
        %862 = sbr.rel (%p860) target = $region104
      $region103: #{tpu_custom_call.1} parent=5 // pred_region
        %s863 = ssub.s32 %s29, 2
        // Predicated region
        $region105: #{tpu_custom_call.1} parent=103 // pred_check
          %p864 = pneg %p320
        $region106: #{tpu_custom_call.1} parent=103 // pred_check_branch
          %866 = sbr.rel (%p864) target = $region108
        $region107: #{tpu_custom_call.1} parent=103 // pred_region
          %s867 = sand.u32 %s305, 1
          %s868 = scalar_lea.sflag [#allocation4], %s867
          %s869 = sand.u32 %s305, 1
          %s870 = smul.addr %s869, 16
          %s871 = scalar_lea.vmem [#allocation14], %s870
          %873 = dma.done %s868, 256
        $region108: #{tpu_custom_call.1} parent=103 // pred_fallthru
          _
      $region104: #{tpu_custom_call.1} parent=5 // pred_fallthru
        _
    $region6: #{tpu_custom_call.1} parent=1 // loop_footer
      %s33 = sadd.s32 1, %s29
    $region7: #{tpu_custom_call.1} parent=1 // loop_footer_branch
      %28 = sbr.rel target = $region3
    $region8: #{tpu_custom_call.1} parent=1 // loop_exit
      _
    %874 = vsyncpa [#allocation3], 1
    %s875 = scalar_lea.sflag [#allocation3], 1
    %876 = vsyncpa %s875, 1
    %877 = vsyncpa [#allocation6], 1
    %s878 = scalar_lea.sflag [#allocation6], 1
    %879 = vsyncpa %s878, 1
    %880 = vsyncpa [#allocation9], 1
    %881 = vsyncpa [#allocation12], 1
    %882 = vsyncpa [#allocation4], 1
    %s883 = scalar_lea.sflag [#allocation4], 1
    %884 = vsyncpa %s883, 1

</llo_original>
